<compile_context>
chip_gen: v6e
topology: v6e:2x2x1
jax: 0.10.0
libtpu: 0.0.40
codegen_flags: <defaults>
</compile_context>

<pallas_src>
import jax
import jax.numpy as jnp
from jax.experimental import pallas as pl
from jax.experimental.pallas import tpu as pltpu


def _permute_kernel(x_ref, o_ref):
    # x_ref block: (TB, TS, TH)  ->  o_ref block: (TB, TH, TS)
    # TB is a small static constant; a 2-D transpose per batch slice keeps the
    # lowering simple and lane-layout friendly.
    for b in range(x_ref.shape[0]):
        o_ref[b] = x_ref[b].T


def _round_up(x, m):
    return ((x + m - 1) // m) * m


def _pick_plane_tile(dim, target):
    """Largest multiple of 128 that divides `dim` and is <= target.

    `dim` is always a multiple of 128 here (the wrapper pads), so this always
    terminates at >= 128."""
    t = min(dim, max(128, (target // 128) * 128))
    while dim % t != 0:
        t -= 128
    return t


def _pick_batch_tile(B, plane_bytes, budget_bytes):
    """Fuse batch elements per grid step when the (S, H) plane fits in one
    tile, amortizing the ~0.35 us per-step overhead.  Keeps the double-buffered
    working set (2x in + 2x out) under `budget_bytes`, requires TB | B, and
    caps TB so the grid keeps >= 2 parallel steps (both v7x TensorCores)."""
    per_batch = 4 * plane_bytes  # in + out, double buffered
    tb = max(1, min(B, budget_bytes // max(per_batch, 1)))
    if B >= 2:
        tb = min(tb, B // 2)  # guarantee >= 2 grid steps on a parallel axis
    tb = max(tb, 1)
    while B % tb != 0:
        tb -= 1
    return tb


def permute_021(x, *, vmem_working_set_bytes=16 << 20, force_pallas=False):
    """Pallas equivalent of torch.permute(x, (0, 2, 1)) for a 3D array.

    (B, S, H) -> (B, H, S)
    """
    B, S, H = x.shape
    itemsize = jnp.dtype(x.dtype).itemsize

    # Tiny planes: per-call overhead + lane-masked stores dominate; XLA wins.
    if not force_pallas and S < 128 and H < 128:
        return jnp.swapaxes(x, 1, 2)

    # Dtype-aware square tile target: ~4 MiB per buffer regardless of dtype
    # (1024 for f32, ~1408 for bf16, 2048 for int8), rounded to 128.
    target = int((float(4 << 20) / itemsize) ** 0.5)
    target = max(128, (target // 128) * 128)

    # Pad S, H up to multiples of 128 so the 2-D tiled, lane-dense path is
    # always taken (bounded VMEM, unmasked stores).  Slice the result back.
    S_p = _round_up(S, 128)
    H_p = _round_up(H, 128)
    x_p = x
    if (S_p, H_p) != (S, H):
        x_p = jnp.pad(x, ((0, 0), (0, S_p - S), (0, H_p - H)))

    TS = _pick_plane_tile(S_p, target)
    TH = _pick_plane_tile(H_p, target)

    if TS == S_p and TH == H_p:
        # Whole plane per step: fuse batches to amortize grid overhead.
        TB = _pick_batch_tile(B, S_p * H_p * itemsize, vmem_working_set_bytes)
    else:
        TB = 1

    grid = (B // TB, S_p // TS, H_p // TH)

    out_p = pl.pallas_call(
        _permute_kernel,
        out_shape=jax.ShapeDtypeStruct((B, H_p, S_p), x.dtype),
        grid_spec=pltpu.PrefetchScalarGridSpec(
            num_scalar_prefetch=0,
            grid=grid,
            in_specs=[pl.BlockSpec((TB, TS, TH), lambda b, i, j: (b, i, j))],
            # Transpose expressed in the output index_map: (b, j, i).
            out_specs=pl.BlockSpec((TB, TH, TS), lambda b, i, j: (b, j, i)),
        ),
        compiler_params=pltpu.CompilerParams(
            dimension_semantics=("parallel", "parallel", "parallel"),
            # ~16 MiB working set; v5e's scoped default is only 16 MiB, so
            # raise it explicitly (fits every generation's physical VMEM).
            vmem_limit_bytes=32 << 20,
        ),
        # Pure memory traffic: tell XLA so it schedules surrounding HLO well.
        cost_estimate=pl.CostEstimate(
            flops=0,
            transcendentals=0,
            bytes_accessed=2 * B * S_p * H_p * itemsize,
        ),
    )(x_p)

    if (S_p, H_p) != (S, H):
        out_p = out_p[:, :H, :S]
    return out_p


if __name__ == "__main__":
    key = jax.random.PRNGKey(0)

    # Primary small test, consistent with a (batch, seq, hidden) tensor.
    # (Tiny plane -> uses the jnp.swapaxes fast path by design.)
    B, S, H = 2, 8, 32
    x = jax.random.normal(key, (B, S, H), dtype=jnp.float32)
    out = jax.block_until_ready(permute_021(x))
    ref = jnp.transpose(x, (0, 2, 1))
    assert out.shape == (B, H, S)
    assert jnp.allclose(out, ref), "Permute mismatch vs reference (small)"

    # Exercise the Pallas tiled path (128-multiple dims, batch-fused grid).
    B2, S2, H2 = 2, 256, 384
    x2 = jax.random.normal(jax.random.PRNGKey(1), (B2, S2, H2), dtype=jnp.float32)
    out2 = jax.block_until_ready(permute_021(x2))
    ref2 = jnp.transpose(x2, (0, 2, 1))
    assert out2.shape == (B2, H2, S2)
    assert jnp.array_equal(out2, ref2), "Pallas permute mismatch (tiled f32)"

    # Exercise the pad -> permute -> slice path (non-128-multiple dims).
    B3, S3, H3 = 2, 200, 160
    x3 = jax.random.normal(jax.random.PRNGKey(2), (B3, S3, H3), dtype=jnp.float32)
    out3 = jax.block_until_ready(permute_021(x3))
    ref3 = jnp.transpose(x3, (0, 2, 1))
    assert out3.shape == (B3, H3, S3)
    assert jnp.array_equal(out3, ref3), "Pallas permute mismatch (padded)"

    # Exercise the dtype-aware (bf16) tiled path.
    B4, S4, H4 = 2, 256, 256
    x4 = jax.random.normal(
        jax.random.PRNGKey(3), (B4, S4, H4), dtype=jnp.float32
    ).astype(jnp.bfloat16)
    out4 = jax.block_until_ready(permute_021(x4))
    ref4 = jnp.transpose(x4, (0, 2, 1))
    assert out4.shape == (B4, H4, S4)
    assert jnp.array_equal(out4, ref4), "Pallas permute mismatch (bf16)"

    print("KERNEL_OK")
</pallas_src>

<mosaic_0001>
module attributes {stable_mosaic.version = 11 : i64} {
  func.func @_permute_kernel(%arg0: i32, %arg1: i32, %arg2: i32, %arg3: memref<1x256x384xf32, #tpu.memory_space<vmem>>, %arg4: memref<1x384x256xf32, #tpu.memory_space<vmem>>) attributes {dimension_semantics = [#tpu.dimension_semantics<parallel>, #tpu.dimension_semantics<parallel>, #tpu.dimension_semantics<parallel>], iteration_bounds = array<i64: 2, 1, 1>, scalar_prefetch = 0 : i64, scratch_operands = 0 : i64, tpu.core_type = #tpu.core_type<tc>, window_params = [{transform_indices = @transform_0, window_bounds = array<i64: 1, 256, 384>}, {transform_indices = @transform_1, window_bounds = array<i64: 1, 384, 256>}]} {
    %c0 = arith.constant 0 : index
    %c0_0 = arith.constant 0 : index
    %c0_1 = arith.constant 0 : index
    %0 = vector.load %arg3[%c0, %c0_0, %c0_1] : memref<1x256x384xf32, #tpu.memory_space<vmem>>, vector<1x256x384xf32>
    %1 = vector.shape_cast %0 : vector<1x256x384xf32> to vector<256x384xf32>
    %2 = tpu.transpose %1, [1, 0] : vector<256x384xf32> -> vector<384x256xf32>
    %c0_2 = arith.constant 0 : index
    %c0_3 = arith.constant 0 : index
    %c0_4 = arith.constant 0 : index
    %3 = vector.load %arg4[%c0_2, %c0_3, %c0_4] : memref<1x384x256xf32, #tpu.memory_space<vmem>>, vector<1x384x256xf32>
    %4 = vector.shape_cast %3 : vector<1x384x256xf32> to vector<384x256xf32>
    %5 = vector.shape_cast %2 : vector<384x256xf32> to vector<1x384x256xf32>
    tpu.vector_store %arg4[%c0_2, %c0_3, %c0_4], %5 {strides = array<i32>} : memref<1x384x256xf32, #tpu.memory_space<vmem>>, vector<1x384x256xf32>,
    return
  }
  func.func @transform_0(%arg0: i32, %arg1: i32, %arg2: i32) -> (i32, i32, i32) {
    %c0_i32 = arith.constant 0 : i32
    return %arg0, %arg1, %arg2 : i32, i32, i32
  }
  func.func @transform_1(%arg0: i32, %arg1: i32, %arg2: i32) -> (i32, i32, i32) {
    %c0_i32 = arith.constant 0 : i32
    return %arg0, %arg2, %arg1 : i32, i32, i32
  }
}

</mosaic_0001>

<llo_original>
// kernel: tpu_custom_call.1
$region0: #{tpu_custom_call.1}
  #allocation0 [shape = 'u32[]', space=smem, size = 0x4, offset = 0x4, fixed_abs, tag = 'smem constant byte address 0x4 - core index']
  #allocation1 [shape = 'u32[144,128]{1,0:T(1,128)}', space=vmem, size = 0x12000, scoped, tag = 'internal scratch']
  %s0 = inlined_call_operand.hbm [shape: f32[2,256,384], index: 0, kind: input, shape index: {}]
  %s1 = inlined_call_operand.hbm [shape: f32[2,384,256], index: 1, kind: output, shape index: {}]
  %s2 = sld [smem:[#allocation0]]
  $region41: #{tpu_custom_call.1} parent=0
    _
  %s4 = ssub.s32 1, %s2
  %s5 = scalar_select 0, %s4, %s2
  $region1: #{tpu_custom_call.1} parent=0
    #allocation2 [shape = 'u8[786432]{0}', space=vmem, size = 0xc0000, scoped, tag = 'input window, operand 0']
    #allocation3 [shape = 's32[2]{0}', space=sflag, size = 0x8, scoped, tag = 'scoped memory for tpu_custom_call.1']
    #allocation4 [shape = 's32[2]{0}', space=sflag, size = 0x8, scoped, tag = 'scoped memory for tpu_custom_call.1']
    #allocation5 [shape = 'u8[786432]{0}', space=vmem, size = 0xc0000, scoped, tag = 'output window, operand 0']
    %6 = vsyncpa [#allocation3], 0
    %s7 = scalar_lea.sflag [#allocation3], 1
    %8 = vsyncpa %s7, 0
    %9 = vsyncpa [#allocation4], 0
    %s10 = scalar_lea.sflag [#allocation4], 1
    %11 = vsyncpa %s10, 0
    loop: start=0, step=1, limit=4
    $region2: #{tpu_custom_call.1} parent=1 // loop_pre_header
      _
    $region3: #{tpu_custom_call.1} parent=1 // loop_header
      %s13 = sphi 0, %s17
      %p14 = scmp.ge.s32.totalorder %s13, 4
      %s20 = sphi 0, %s39
      %s21 = sphi 0, %s35
      %s22 = sphi 0, %s31
      %s23 = sphi 0, %s20
      %s24 = sphi 0, %s21
      %s25 = sphi 0, %s22
      %s26 = sphi 0, %s23
      %s27 = sphi 0, %s24
      %s28 = sphi 0, %s25
      %s46 = sphi 0, %s48
      %s49 = sphi 0, %s46
      %s50 = sphi 0, %s49
      %s66 = sphi 0, %s50
      %s76 = sphi 0, %s78
      %s79 = sphi 0, %s76
      %s80 = sphi 0, %s79
      %s96 = sphi 0, %s80
    $region4: #{tpu_custom_call.1} parent=1 // loop_header_branch
      %16 = sbr.rel (%p14) target = $region8
    $region5: #{tpu_custom_call.1} parent=1 // loop_body
      %s18 = ssub.s32 %s13, 1
      %s19 = ssub.s32 %s13, 2
      %s29 = sadd.s32 1, %s22
      %p30 = scmp.ge.s32.totalorder %s29, 1
      %s31 = scalar_select %p30, 0, %s29
      %s32 = sadd.s32 1, %s21
      %s33 = scalar_select %p30, %s32, %s21
      %p34 = scmp.ge.s32.totalorder %s33, 1
      %s35 = scalar_select %p34, 0, %s33
      %s36 = sadd.s32 1, %s20
      %s37 = scalar_select %p34, %s36, %s20
      %p38 = scmp.ge.s32.totalorder %s37, 2
      %s39 = scalar_select %p38, 0, %s37
      %s40 = ssub.s32 %s20, %s39
      %s41 = ssub.s32 %s21, %s35
      %s42 = sor.u32 %s40, %s41
      %s43 = ssub.s32 %s22, %s31
      %s44 = sor.u32 %s42, %s43
      %p45 = scmp.eq.s32.totalorder %s44, 0
      %s47 = sadd.s32 %s46, 1
      %s48 = scalar_select %p45, %s46, %s47
      %p51 = pneg %p45
      %p52 = scmp.eq.s32.totalorder %s13, 1
      %p53 = por %p51, %p52
      %p54 = scmp.ne.s32.totalorder %s46, %s49
      %p55 = scmp.eq.s32.totalorder %s13, 0
      %p56 = por %p54, %p55
      %p57 = scmp.ne.s32.totalorder %s46, %s49
      %p58 = scmp.eq.s32.totalorder %s18, 1
      %p59 = por %p57, %p58
      %p60 = scmp.ne.s32.totalorder %s49, %s50
      %p61 = scmp.eq.s32.totalorder %s18, 0
      %p62 = por %p60, %p61
      %p63 = scmp.ne.s32.totalorder %s49, %s50
      %p64 = scmp.eq.s32.totalorder %s19, 1
      %p65 = por %p63, %p64
      %p67 = scmp.ne.s32.totalorder %s50, %s66
      %p68 = scmp.eq.s32.totalorder %s19, 0
      %p69 = por %p67, %p68
      %s70 = ssub.s32 %s20, %s39
      %s71 = ssub.s32 %s22, %s31
      %s72 = sor.u32 %s70, %s71
      %s73 = ssub.s32 %s21, %s35
      %s74 = sor.u32 %s72, %s73
      %p75 = scmp.eq.s32.totalorder %s74, 0
      %s77 = sadd.s32 %s76, 1
      %s78 = scalar_select %p75, %s76, %s77
      %p81 = pneg %p75
      %p82 = scmp.eq.s32.totalorder %s13, 1
      %p83 = por %p81, %p82
      %p84 = scmp.ne.s32.totalorder %s76, %s79
      %p85 = scmp.eq.s32.totalorder %s13, 0
      %p86 = por %p84, %p85
      %p87 = scmp.ne.s32.totalorder %s76, %s79
      %p88 = scmp.eq.s32.totalorder %s18, 1
      %p89 = por %p87, %p88
      %p90 = scmp.ne.s32.totalorder %s79, %s80
      %p91 = scmp.eq.s32.totalorder %s18, 0
      %p92 = por %p90, %p91
      %p93 = scmp.ne.s32.totalorder %s79, %s80
      %p94 = scmp.eq.s32.totalorder %s19, 1
      %p95 = por %p93, %p94
      %p97 = scmp.ne.s32.totalorder %s80, %s96
      %p98 = scmp.eq.s32.totalorder %s19, 0
      %p99 = por %p97, %p98
      %p100 = scmp.le.s32.totalorder 1, %s13
      %p101 = scmp.lt.s32.totalorder %s13, 3
      %p102 = pnand %p100, %p101
      %p103 = pneg %p102
      // Predicated region
      $region9: #{tpu_custom_call.1} parent=5 // pred_check
        _
      $region10: #{tpu_custom_call.1} parent=5 // pred_check_branch
        %105 = sbr.rel (%p102) target = $region12
      $region11: #{tpu_custom_call.1} parent=5 // pred_region
        %s106 = ssub.s32 %s13, 1
      $region12: #{tpu_custom_call.1} parent=5 // pred_fallthru
        _
      %p107 = scmp.lt.s32.totalorder %s13, 2
      // Predicated region
      $region13: #{tpu_custom_call.1} parent=5 // pred_check
        %p108 = pneg %p107
      $region14: #{tpu_custom_call.1} parent=5 // pred_check_branch
        %110 = sbr.rel (%p108) target = $region16
      $region15: #{tpu_custom_call.1} parent=5 // pred_region
        // Predicated region
        $region17: #{tpu_custom_call.1} parent=15 // pred_check
          %p111 = pneg %p56
        $region18: #{tpu_custom_call.1} parent=15 // pred_check_branch
          %113 = sbr.rel (%p111) target = $region20
        $region19: #{tpu_custom_call.1} parent=15 // pred_region
          %s114 = sand.u32 %s46, 1
          %s115 = scalar_lea.sflag [#allocation3], %s114
          %s116 = sand.u32 %s46, 1
          %s117 = smul.addr %s116, 768
          %s118 = scalar_lea.vmem [#allocation2], %s117
          %s119 = smul.u32 32, %s21
          %s120 = smul.u32 3, %s22
          %s122 = ssub.s32 12288, 12288
          %123 = vsyncadd %s115, %s122
          %s124 = smul.addr %s119, 3
          %s125 = sadd.s32 %s120, %s124
          %s126 = smul.addr %s20, 96
          %s127 = sadd.s32 %s125, %s126
          %s128 = smul.addr %s127, 128
          %s129 = scalar_lea.hbm %s0, %s128
          %s130 = sshll.u32 %s118, 4
          %s131 = int_to_ptr.vmem [resolvable:$true] %s130
          %136 = dma.hbm_to_vmem [thread:$0]  %s129, 12288, %s131, %s115, 384, 384, 24
        $region20: #{tpu_custom_call.1} parent=15 // pred_fallthru
          _
      $region16: #{tpu_custom_call.1} parent=5 // pred_fallthru
        _
      %p137 = scmp.le.s32.totalorder 1, %s13
      %p138 = scmp.lt.s32.totalorder %s13, 3
      %p139 = pnand %p137, %p138
      %p140 = pneg %p139
      // Predicated region
      $region21: #{tpu_custom_call.1} parent=5 // pred_check
        _
      $region22: #{tpu_custom_call.1} parent=5 // pred_check_branch
        %142 = sbr.rel (%p139) target = $region24
      $region23: #{tpu_custom_call.1} parent=5 // pred_region
        %s143 = ssub.s32 %s13, 1
        %s144 = sand.u32 %s49, 1
        %s145 = scalar_lea.sflag [#allocation3], %s144
        %s146 = sand.u32 %s49, 1
        %s147 = smul.addr %s146, 768
        %s148 = scalar_lea.vmem [#allocation2], %s147
        // Predicated region
        $region25: #{tpu_custom_call.1} parent=23 // pred_check
          %p149 = pneg %p62
        $region26: #{tpu_custom_call.1} parent=23 // pred_check_branch
          %151 = sbr.rel (%p149) target = $region28
        $region27: #{tpu_custom_call.1} parent=23 // pred_region
          %152 = dma.done %s145, 12288
        $region28: #{tpu_custom_call.1} parent=23 // pred_fallthru
          _
        %s153 = sand.u32 %s49, 1
        %s154 = scalar_lea.sflag [#allocation3], %s153
        %s155 = sand.u32 %s49, 1
        %s156 = smul.addr %s155, 768
        %s157 = scalar_lea.vmem [#allocation2], %s156
        %p158 = pneg %p62
        %p159 = pneg %p59
        %p160 = pneg %p92
        %p161 = pneg %p89
        %s162 = sand.u32 %s79, 1
        %s163 = scalar_lea.sflag [#allocation4], %s162
        %s164 = sand.u32 %s79, 1
        %s165 = smul.addr %s164, 768
        %s166 = scalar_lea.vmem [#allocation5], %s165
        %s167 = smul.u32 32, %s24
        %s168 = smul.u32 3, %s25
        %s169 = smul.u32 48, %s25
        %s170 = smul.u32 2, %s24
        %v171 = vld [vmem:[%s148] sm:$0xff]
        %v172 = vld [vmem:[%s148 + $0x8] sm:$0xff]
        %v173 = vld [vmem:[%s148 + $0x10] sm:$0xff]
        %v174 = vld [vmem:[%s148 + $0x18] sm:$0xff]
        %v175 = vld [vmem:[%s148 + $0x20] sm:$0xff]
        %v176 = vld [vmem:[%s148 + $0x28] sm:$0xff]
        %v177 = vld [vmem:[%s148 + $0x30] sm:$0xff]
        %v178 = vld [vmem:[%s148 + $0x38] sm:$0xff]
        %v179 = vld [vmem:[%s148 + $0x40] sm:$0xff]
        %v180 = vld [vmem:[%s148 + $0x48] sm:$0xff]
        %v181 = vld [vmem:[%s148 + $0x50] sm:$0xff]
        %v182 = vld [vmem:[%s148 + $0x58] sm:$0xff]
        %v183 = vld [vmem:[%s148 + $0x60] sm:$0xff]
        %v184 = vld [vmem:[%s148 + $0x68] sm:$0xff]
        %v185 = vld [vmem:[%s148 + $0x70] sm:$0xff]
        %v186 = vld [vmem:[%s148 + $0x78] sm:$0xff]
        %v187 = vld [vmem:[%s148 + $0x80] sm:$0xff]
        %v188 = vld [vmem:[%s148 + $0x88] sm:$0xff]
        %v189 = vld [vmem:[%s148 + $0x90] sm:$0xff]
        %v190 = vld [vmem:[%s148 + $0x98] sm:$0xff]
        %v191 = vld [vmem:[%s148 + $0xa0] sm:$0xff]
        %v192 = vld [vmem:[%s148 + $0xa8] sm:$0xff]
        %v193 = vld [vmem:[%s148 + $0xb0] sm:$0xff]
        %v194 = vld [vmem:[%s148 + $0xb8] sm:$0xff]
        %v195 = vld [vmem:[%s148 + $0xc0] sm:$0xff]
        %v196 = vld [vmem:[%s148 + $0xc8] sm:$0xff]
        %v197 = vld [vmem:[%s148 + $0xd0] sm:$0xff]
        %v198 = vld [vmem:[%s148 + $0xd8] sm:$0xff]
        %v199 = vld [vmem:[%s148 + $0xe0] sm:$0xff]
        %v200 = vld [vmem:[%s148 + $0xe8] sm:$0xff]
        %v201 = vld [vmem:[%s148 + $0xf0] sm:$0xff]
        %v202 = vld [vmem:[%s148 + $0xf8] sm:$0xff]
        %v203 = vld [vmem:[%s148 + $0x100] sm:$0xff]
        %v204 = vld [vmem:[%s148 + $0x108] sm:$0xff]
        %v205 = vld [vmem:[%s148 + $0x110] sm:$0xff]
        %v206 = vld [vmem:[%s148 + $0x118] sm:$0xff]
        %v207 = vld [vmem:[%s148 + $0x120] sm:$0xff]
        %v208 = vld [vmem:[%s148 + $0x128] sm:$0xff]
        %v209 = vld [vmem:[%s148 + $0x130] sm:$0xff]
        %v210 = vld [vmem:[%s148 + $0x138] sm:$0xff]
        %v211 = vld [vmem:[%s148 + $0x140] sm:$0xff]
        %v212 = vld [vmem:[%s148 + $0x148] sm:$0xff]
        %v213 = vld [vmem:[%s148 + $0x150] sm:$0xff]
        %v214 = vld [vmem:[%s148 + $0x158] sm:$0xff]
        %v215 = vld [vmem:[%s148 + $0x160] sm:$0xff]
        %v216 = vld [vmem:[%s148 + $0x168] sm:$0xff]
        %v217 = vld [vmem:[%s148 + $0x170] sm:$0xff]
        %v218 = vld [vmem:[%s148 + $0x178] sm:$0xff]
        %v219 = vld [vmem:[%s148 + $0x180] sm:$0xff]
        %v220 = vld [vmem:[%s148 + $0x188] sm:$0xff]
        %v221 = vld [vmem:[%s148 + $0x190] sm:$0xff]
        %v222 = vld [vmem:[%s148 + $0x198] sm:$0xff]
        %v223 = vld [vmem:[%s148 + $0x1a0] sm:$0xff]
        %v224 = vld [vmem:[%s148 + $0x1a8] sm:$0xff]
        %v225 = vld [vmem:[%s148 + $0x1b0] sm:$0xff]
        %v226 = vld [vmem:[%s148 + $0x1b8] sm:$0xff]
        %v227 = vld [vmem:[%s148 + $0x1c0] sm:$0xff]
        %v228 = vld [vmem:[%s148 + $0x1c8] sm:$0xff]
        %v229 = vld [vmem:[%s148 + $0x1d0] sm:$0xff]
        %v230 = vld [vmem:[%s148 + $0x1d8] sm:$0xff]
        %v231 = vld [vmem:[%s148 + $0x1e0] sm:$0xff]
        %v232 = vld [vmem:[%s148 + $0x1e8] sm:$0xff]
        %v233 = vld [vmem:[%s148 + $0x1f0] sm:$0xff]
        %v234 = vld [vmem:[%s148 + $0x1f8] sm:$0xff]
        %v235 = vld [vmem:[%s148 + $0x200] sm:$0xff]
        %v236 = vld [vmem:[%s148 + $0x208] sm:$0xff]
        %v237 = vld [vmem:[%s148 + $0x210] sm:$0xff]
        %v238 = vld [vmem:[%s148 + $0x218] sm:$0xff]
        %v239 = vld [vmem:[%s148 + $0x220] sm:$0xff]
        %v240 = vld [vmem:[%s148 + $0x228] sm:$0xff]
        %v241 = vld [vmem:[%s148 + $0x230] sm:$0xff]
        %v242 = vld [vmem:[%s148 + $0x238] sm:$0xff]
        %v243 = vld [vmem:[%s148 + $0x240] sm:$0xff]
        %v244 = vld [vmem:[%s148 + $0x248] sm:$0xff]
        %v245 = vld [vmem:[%s148 + $0x250] sm:$0xff]
        %v246 = vld [vmem:[%s148 + $0x258] sm:$0xff]
        %v247 = vld [vmem:[%s148 + $0x260] sm:$0xff]
        %v248 = vld [vmem:[%s148 + $0x268] sm:$0xff]
        %v249 = vld [vmem:[%s148 + $0x270] sm:$0xff]
        %v250 = vld [vmem:[%s148 + $0x278] sm:$0xff]
        %v251 = vld [vmem:[%s148 + $0x280] sm:$0xff]
        %v252 = vld [vmem:[%s148 + $0x288] sm:$0xff]
        %v253 = vld [vmem:[%s148 + $0x290] sm:$0xff]
        %v254 = vld [vmem:[%s148 + $0x298] sm:$0xff]
        %v255 = vld [vmem:[%s148 + $0x2a0] sm:$0xff]
        %v256 = vld [vmem:[%s148 + $0x2a8] sm:$0xff]
        %v257 = vld [vmem:[%s148 + $0x2b0] sm:$0xff]
        %v258 = vld [vmem:[%s148 + $0x2b8] sm:$0xff]
        %v259 = vld [vmem:[%s148 + $0x2c0] sm:$0xff]
        %v260 = vld [vmem:[%s148 + $0x2c8] sm:$0xff]
        %v261 = vld [vmem:[%s148 + $0x2d0] sm:$0xff]
        %v262 = vld [vmem:[%s148 + $0x2d8] sm:$0xff]
        %v263 = vld [vmem:[%s148 + $0x2e0] sm:$0xff]
        %v264 = vld [vmem:[%s148 + $0x2e8] sm:$0xff]
        %v265 = vld [vmem:[%s148 + $0x2f0] sm:$0xff]
        %v266 = vld [vmem:[%s148 + $0x2f8] sm:$0xff]
        %267 = vxpose.xlu0.b32.start [1/16] %v171, 128
        %268 = vxpose.xlu0.b32.cont [2/16] %v174, 128
        %269 = vxpose.xlu0.b32.cont [3/16] %v177, 128
        %270 = vxpose.xlu0.b32.cont [4/16] %v180, 128
        %271 = vxpose.xlu0.b32.cont [5/16] %v183, 128
        %272 = vxpose.xlu0.b32.cont [6/16] %v186, 128
        %273 = vxpose.xlu0.b32.cont [7/16] %v189, 128
        %274 = vxpose.xlu0.b32.cont [8/16] %v192, 128
        %275 = vxpose.xlu0.b32.cont [9/16] %v195, 128
        %276 = vxpose.xlu0.b32.cont [10/16] %v198, 128
        %277 = vxpose.xlu0.b32.cont [11/16] %v201, 128
        %278 = vxpose.xlu0.b32.cont [12/16] %v204, 128
        %279 = vxpose.xlu0.b32.cont [13/16] %v207, 128
        %280 = vxpose.xlu0.b32.cont [14/16] %v210, 128
        %281 = vxpose.xlu0.b32.cont [15/16] %v213, 128
        %282 = vxpose.xlu0.b32.end [16/16] %v216, 128
        %v283 = vpop.trf.xlu0
        %v284 = vpop.trf.xlu0
        %v285 = vpop.trf.xlu0
        %v286 = vpop.trf.xlu0
        %v287 = vpop.trf.xlu0
        %v288 = vpop.trf.xlu0
        %v289 = vpop.trf.xlu0
        %v290 = vpop.trf.xlu0
        %v291 = vpop.trf.xlu0
        %v292 = vpop.trf.xlu0
        %v293 = vpop.trf.xlu0
        %v294 = vpop.trf.xlu0
        %v295 = vpop.trf.xlu0
        %v296 = vpop.trf.xlu0
        %v297 = vpop.trf.xlu0
        %v298 = vpop.trf.xlu0
        %299 = vxpose.xlu0.b32.start [1/16] %v172, 128
        %300 = vxpose.xlu0.b32.cont [2/16] %v175, 128
        %301 = vxpose.xlu0.b32.cont [3/16] %v178, 128
        %302 = vxpose.xlu0.b32.cont [4/16] %v181, 128
        %303 = vxpose.xlu0.b32.cont [5/16] %v184, 128
        %304 = vxpose.xlu0.b32.cont [6/16] %v187, 128
        %305 = vxpose.xlu0.b32.cont [7/16] %v190, 128
        %306 = vxpose.xlu0.b32.cont [8/16] %v193, 128
        %307 = vxpose.xlu0.b32.cont [9/16] %v196, 128
        %308 = vxpose.xlu0.b32.cont [10/16] %v199, 128
        %309 = vxpose.xlu0.b32.cont [11/16] %v202, 128
        %310 = vxpose.xlu0.b32.cont [12/16] %v205, 128
        %311 = vxpose.xlu0.b32.cont [13/16] %v208, 128
        %312 = vxpose.xlu0.b32.cont [14/16] %v211, 128
        %313 = vxpose.xlu0.b32.cont [15/16] %v214, 128
        %314 = vxpose.xlu0.b32.end [16/16] %v217, 128
        %v315 = vpop.trf.xlu0
        %v316 = vpop.trf.xlu0
        %v317 = vpop.trf.xlu0
        %v318 = vpop.trf.xlu0
        %v319 = vpop.trf.xlu0
        %v320 = vpop.trf.xlu0
        %v321 = vpop.trf.xlu0
        %v322 = vpop.trf.xlu0
        %v323 = vpop.trf.xlu0
        %v324 = vpop.trf.xlu0
        %v325 = vpop.trf.xlu0
        %v326 = vpop.trf.xlu0
        %v327 = vpop.trf.xlu0
        %v328 = vpop.trf.xlu0
        %v329 = vpop.trf.xlu0
        %v330 = vpop.trf.xlu0
        %331 = vxpose.xlu0.b32.start [1/16] %v173, 128
        %332 = vxpose.xlu0.b32.cont [2/16] %v176, 128
        %333 = vxpose.xlu0.b32.cont [3/16] %v179, 128
        %334 = vxpose.xlu0.b32.cont [4/16] %v182, 128
        %335 = vxpose.xlu0.b32.cont [5/16] %v185, 128
        %336 = vxpose.xlu0.b32.cont [6/16] %v188, 128
        %337 = vxpose.xlu0.b32.cont [7/16] %v191, 128
        %338 = vxpose.xlu0.b32.cont [8/16] %v194, 128
        %339 = vxpose.xlu0.b32.cont [9/16] %v197, 128
        %340 = vxpose.xlu0.b32.cont [10/16] %v200, 128
        %341 = vxpose.xlu0.b32.cont [11/16] %v203, 128
        %342 = vxpose.xlu0.b32.cont [12/16] %v206, 128
        %343 = vxpose.xlu0.b32.cont [13/16] %v209, 128
        %344 = vxpose.xlu0.b32.cont [14/16] %v212, 128
        %345 = vxpose.xlu0.b32.cont [15/16] %v215, 128
        %346 = vxpose.xlu0.b32.end [16/16] %v218, 128
        %v347 = vpop.trf.xlu0
        %v348 = vpop.trf.xlu0
        %v349 = vpop.trf.xlu0
        %v350 = vpop.trf.xlu0
        %v351 = vpop.trf.xlu0
        %v352 = vpop.trf.xlu0
        %v353 = vpop.trf.xlu0
        %v354 = vpop.trf.xlu0
        %v355 = vpop.trf.xlu0
        %v356 = vpop.trf.xlu0
        %v357 = vpop.trf.xlu0
        %v358 = vpop.trf.xlu0
        %v359 = vpop.trf.xlu0
        %v360 = vpop.trf.xlu0
        %v361 = vpop.trf.xlu0
        %v362 = vpop.trf.xlu0
        %363 = vxpose.xlu0.b32.start [1/16] %v219, 128
        %364 = vxpose.xlu0.b32.cont [2/16] %v222, 128
        %365 = vxpose.xlu0.b32.cont [3/16] %v225, 128
        %366 = vxpose.xlu0.b32.cont [4/16] %v228, 128
        %367 = vxpose.xlu0.b32.cont [5/16] %v231, 128
        %368 = vxpose.xlu0.b32.cont [6/16] %v234, 128
        %369 = vxpose.xlu0.b32.cont [7/16] %v237, 128
        %370 = vxpose.xlu0.b32.cont [8/16] %v240, 128
        %371 = vxpose.xlu0.b32.cont [9/16] %v243, 128
        %372 = vxpose.xlu0.b32.cont [10/16] %v246, 128
        %373 = vxpose.xlu0.b32.cont [11/16] %v249, 128
        %374 = vxpose.xlu0.b32.cont [12/16] %v252, 128
        %375 = vxpose.xlu0.b32.cont [13/16] %v255, 128
        %376 = vxpose.xlu0.b32.cont [14/16] %v258, 128
        %377 = vxpose.xlu0.b32.cont [15/16] %v261, 128
        %378 = vxpose.xlu0.b32.end [16/16] %v264, 128
        %v379 = vpop.trf.xlu0
        %v380 = vpop.trf.xlu0
        %v381 = vpop.trf.xlu0
        %v382 = vpop.trf.xlu0
        %v383 = vpop.trf.xlu0
        %v384 = vpop.trf.xlu0
        %v385 = vpop.trf.xlu0
        %v386 = vpop.trf.xlu0
        %v387 = vpop.trf.xlu0
        %v388 = vpop.trf.xlu0
        %v389 = vpop.trf.xlu0
        %v390 = vpop.trf.xlu0
        %v391 = vpop.trf.xlu0
        %v392 = vpop.trf.xlu0
        %v393 = vpop.trf.xlu0
        %v394 = vpop.trf.xlu0
        %395 = vxpose.xlu0.b32.start [1/16] %v220, 128
        %396 = vxpose.xlu0.b32.cont [2/16] %v223, 128
        %397 = vxpose.xlu0.b32.cont [3/16] %v226, 128
        %398 = vxpose.xlu0.b32.cont [4/16] %v229, 128
        %399 = vxpose.xlu0.b32.cont [5/16] %v232, 128
        %400 = vxpose.xlu0.b32.cont [6/16] %v235, 128
        %401 = vxpose.xlu0.b32.cont [7/16] %v238, 128
        %402 = vxpose.xlu0.b32.cont [8/16] %v241, 128
        %403 = vxpose.xlu0.b32.cont [9/16] %v244, 128
        %404 = vxpose.xlu0.b32.cont [10/16] %v247, 128
        %405 = vxpose.xlu0.b32.cont [11/16] %v250, 128
        %406 = vxpose.xlu0.b32.cont [12/16] %v253, 128
        %407 = vxpose.xlu0.b32.cont [13/16] %v256, 128
        %408 = vxpose.xlu0.b32.cont [14/16] %v259, 128
        %409 = vxpose.xlu0.b32.cont [15/16] %v262, 128
        %410 = vxpose.xlu0.b32.end [16/16] %v265, 128
        %v411 = vpop.trf.xlu0
        %v412 = vpop.trf.xlu0
        %v413 = vpop.trf.xlu0
        %v414 = vpop.trf.xlu0
        %v415 = vpop.trf.xlu0
        %v416 = vpop.trf.xlu0
        %v417 = vpop.trf.xlu0
        %v418 = vpop.trf.xlu0
        %v419 = vpop.trf.xlu0
        %v420 = vpop.trf.xlu0
        %v421 = vpop.trf.xlu0
        %v422 = vpop.trf.xlu0
        %v423 = vpop.trf.xlu0
        %v424 = vpop.trf.xlu0
        %v425 = vpop.trf.xlu0
        %v426 = vpop.trf.xlu0
        %427 = vxpose.xlu0.b32.start [1/16] %v221, 128
        %428 = vxpose.xlu0.b32.cont [2/16] %v224, 128
        %429 = vxpose.xlu0.b32.cont [3/16] %v227, 128
        %430 = vxpose.xlu0.b32.cont [4/16] %v230, 128
        %431 = vxpose.xlu0.b32.cont [5/16] %v233, 128
        %432 = vxpose.xlu0.b32.cont [6/16] %v236, 128
        %433 = vxpose.xlu0.b32.cont [7/16] %v239, 128
        %434 = vxpose.xlu0.b32.cont [8/16] %v242, 128
        %435 = vxpose.xlu0.b32.cont [9/16] %v245, 128
        %436 = vxpose.xlu0.b32.cont [10/16] %v248, 128
        %437 = vxpose.xlu0.b32.cont [11/16] %v251, 128
        %438 = vxpose.xlu0.b32.cont [12/16] %v254, 128
        %439 = vxpose.xlu0.b32.cont [13/16] %v257, 128
        %440 = vxpose.xlu0.b32.cont [14/16] %v260, 128
        %441 = vxpose.xlu0.b32.cont [15/16] %v263, 128
        %442 = vxpose.xlu0.b32.end [16/16] %v266, 128
        %v443 = vpop.trf.xlu0
        %v444 = vpop.trf.xlu0
        %v445 = vpop.trf.xlu0
        %v446 = vpop.trf.xlu0
        %v447 = vpop.trf.xlu0
        %v448 = vpop.trf.xlu0
        %v449 = vpop.trf.xlu0
        %v450 = vpop.trf.xlu0
        %v451 = vpop.trf.xlu0
        %v452 = vpop.trf.xlu0
        %v453 = vpop.trf.xlu0
        %v454 = vpop.trf.xlu0
        %v455 = vpop.trf.xlu0
        %v456 = vpop.trf.xlu0
        %v457 = vpop.trf.xlu0
        %v458 = vpop.trf.xlu0
        %459 = vst [vmem:[%s166] sm:$0xff] %v283
        %460 = vst [vmem:[%s166 + $0x8] sm:$0xff] %v379
        %461 = vst [vmem:[%s166 + $0x10] sm:$0xff] %v284
        %462 = vst [vmem:[%s166 + $0x18] sm:$0xff] %v380
        %463 = vst [vmem:[%s166 + $0x20] sm:$0xff] %v285
        %464 = vst [vmem:[%s166 + $0x28] sm:$0xff] %v381
        %465 = vst [vmem:[%s166 + $0x30] sm:$0xff] %v286
        %466 = vst [vmem:[%s166 + $0x38] sm:$0xff] %v382
        %467 = vst [vmem:[%s166 + $0x40] sm:$0xff] %v287
        %468 = vst [vmem:[%s166 + $0x48] sm:$0xff] %v383
        %469 = vst [vmem:[%s166 + $0x50] sm:$0xff] %v288
        %470 = vst [vmem:[%s166 + $0x58] sm:$0xff] %v384
        %471 = vst [vmem:[%s166 + $0x60] sm:$0xff] %v289
        %472 = vst [vmem:[%s166 + $0x68] sm:$0xff] %v385
        %473 = vst [vmem:[%s166 + $0x70] sm:$0xff] %v290
        %474 = vst [vmem:[%s166 + $0x78] sm:$0xff] %v386
        %475 = vst [vmem:[%s166 + $0x80] sm:$0xff] %v291
        %476 = vst [vmem:[%s166 + $0x88] sm:$0xff] %v387
        %477 = vst [vmem:[%s166 + $0x90] sm:$0xff] %v292
        %478 = vst [vmem:[%s166 + $0x98] sm:$0xff] %v388
        %479 = vst [vmem:[%s166 + $0xa0] sm:$0xff] %v293
        %480 = vst [vmem:[%s166 + $0xa8] sm:$0xff] %v389
        %481 = vst [vmem:[%s166 + $0xb0] sm:$0xff] %v294
        %482 = vst [vmem:[%s166 + $0xb8] sm:$0xff] %v390
        %483 = vst [vmem:[%s166 + $0xc0] sm:$0xff] %v295
        %484 = vst [vmem:[%s166 + $0xc8] sm:$0xff] %v391
        %485 = vst [vmem:[%s166 + $0xd0] sm:$0xff] %v296
        %486 = vst [vmem:[%s166 + $0xd8] sm:$0xff] %v392
        %487 = vst [vmem:[%s166 + $0xe0] sm:$0xff] %v297
        %488 = vst [vmem:[%s166 + $0xe8] sm:$0xff] %v393
        %489 = vst [vmem:[%s166 + $0xf0] sm:$0xff] %v298
        %490 = vst [vmem:[%s166 + $0xf8] sm:$0xff] %v394
        %491 = vst [vmem:[%s166 + $0x100] sm:$0xff] %v315
        %492 = vst [vmem:[%s166 + $0x108] sm:$0xff] %v411
        %493 = vst [vmem:[%s166 + $0x110] sm:$0xff] %v316
        %494 = vst [vmem:[%s166 + $0x118] sm:$0xff] %v412
        %495 = vst [vmem:[%s166 + $0x120] sm:$0xff] %v317
        %496 = vst [vmem:[%s166 + $0x128] sm:$0xff] %v413
        %497 = vst [vmem:[%s166 + $0x130] sm:$0xff] %v318
        %498 = vst [vmem:[%s166 + $0x138] sm:$0xff] %v414
        %499 = vst [vmem:[%s166 + $0x140] sm:$0xff] %v319
        %500 = vst [vmem:[%s166 + $0x148] sm:$0xff] %v415
        %501 = vst [vmem:[%s166 + $0x150] sm:$0xff] %v320
        %502 = vst [vmem:[%s166 + $0x158] sm:$0xff] %v416
        %503 = vst [vmem:[%s166 + $0x160] sm:$0xff] %v321
        %504 = vst [vmem:[%s166 + $0x168] sm:$0xff] %v417
        %505 = vst [vmem:[%s166 + $0x170] sm:$0xff] %v322
        %506 = vst [vmem:[%s166 + $0x178] sm:$0xff] %v418
        %507 = vst [vmem:[%s166 + $0x180] sm:$0xff] %v323
        %508 = vst [vmem:[%s166 + $0x188] sm:$0xff] %v419
        %509 = vst [vmem:[%s166 + $0x190] sm:$0xff] %v324
        %510 = vst [vmem:[%s166 + $0x198] sm:$0xff] %v420
        %511 = vst [vmem:[%s166 + $0x1a0] sm:$0xff] %v325
        %512 = vst [vmem:[%s166 + $0x1a8] sm:$0xff] %v421
        %513 = vst [vmem:[%s166 + $0x1b0] sm:$0xff] %v326
        %514 = vst [vmem:[%s166 + $0x1b8] sm:$0xff] %v422
        %515 = vst [vmem:[%s166 + $0x1c0] sm:$0xff] %v327
        %516 = vst [vmem:[%s166 + $0x1c8] sm:$0xff] %v423
        %517 = vst [vmem:[%s166 + $0x1d0] sm:$0xff] %v328
        %518 = vst [vmem:[%s166 + $0x1d8] sm:$0xff] %v424
        %519 = vst [vmem:[%s166 + $0x1e0] sm:$0xff] %v329
        %520 = vst [vmem:[%s166 + $0x1e8] sm:$0xff] %v425
        %521 = vst [vmem:[%s166 + $0x1f0] sm:$0xff] %v330
        %522 = vst [vmem:[%s166 + $0x1f8] sm:$0xff] %v426
        %523 = vst [vmem:[%s166 + $0x200] sm:$0xff] %v347
        %524 = vst [vmem:[%s166 + $0x208] sm:$0xff] %v443
        %525 = vst [vmem:[%s166 + $0x210] sm:$0xff] %v348
        %526 = vst [vmem:[%s166 + $0x218] sm:$0xff] %v444
        %527 = vst [vmem:[%s166 + $0x220] sm:$0xff] %v349
        %528 = vst [vmem:[%s166 + $0x228] sm:$0xff] %v445
        %529 = vst [vmem:[%s166 + $0x230] sm:$0xff] %v350
        %530 = vst [vmem:[%s166 + $0x238] sm:$0xff] %v446
        %531 = vst [vmem:[%s166 + $0x240] sm:$0xff] %v351
        %532 = vst [vmem:[%s166 + $0x248] sm:$0xff] %v447
        %533 = vst [vmem:[%s166 + $0x250] sm:$0xff] %v352
        %534 = vst [vmem:[%s166 + $0x258] sm:$0xff] %v448
        %535 = vst [vmem:[%s166 + $0x260] sm:$0xff] %v353
        %536 = vst [vmem:[%s166 + $0x268] sm:$0xff] %v449
        %537 = vst [vmem:[%s166 + $0x270] sm:$0xff] %v354
        %538 = vst [vmem:[%s166 + $0x278] sm:$0xff] %v450
        %539 = vst [vmem:[%s166 + $0x280] sm:$0xff] %v355
        %540 = vst [vmem:[%s166 + $0x288] sm:$0xff] %v451
        %541 = vst [vmem:[%s166 + $0x290] sm:$0xff] %v356
        %542 = vst [vmem:[%s166 + $0x298] sm:$0xff] %v452
        %543 = vst [vmem:[%s166 + $0x2a0] sm:$0xff] %v357
        %544 = vst [vmem:[%s166 + $0x2a8] sm:$0xff] %v453
        %545 = vst [vmem:[%s166 + $0x2b0] sm:$0xff] %v358
        %546 = vst [vmem:[%s166 + $0x2b8] sm:$0xff] %v454
        %547 = vst [vmem:[%s166 + $0x2c0] sm:$0xff] %v359
        %548 = vst [vmem:[%s166 + $0x2c8] sm:$0xff] %v455
        %549 = vst [vmem:[%s166 + $0x2d0] sm:$0xff] %v360
        %550 = vst [vmem:[%s166 + $0x2d8] sm:$0xff] %v456
        %551 = vst [vmem:[%s166 + $0x2e0] sm:$0xff] %v361
        %552 = vst [vmem:[%s166 + $0x2e8] sm:$0xff] %v457
        %553 = vst [vmem:[%s166 + $0x2f0] sm:$0xff] %v362
        %554 = vst [vmem:[%s166 + $0x2f8] sm:$0xff] %v458
        %s555 = sand.u32 %s79, 1
        %s556 = scalar_lea.sflag [#allocation4], %s555
        %s557 = sand.u32 %s79, 1
        %s558 = smul.addr %s557, 768
        %s559 = scalar_lea.vmem [#allocation5], %s558
        // Predicated region
        $region29: #{tpu_custom_call.1} parent=23 // pred_check
          %p560 = pneg %p89
        $region30: #{tpu_custom_call.1} parent=23 // pred_check_branch
          %562 = sbr.rel (%p560) target = $region32
        $region31: #{tpu_custom_call.1} parent=23 // pred_region
          %s563 = smul.u32 48, %s25
          %s564 = smul.u32 2, %s24
          %s566 = ssub.s32 12288, 12288
          %567 = vsyncadd %s556, %s566
          %s568 = smul.addr %s563, 2
          %s569 = sadd.s32 %s564, %s568
          %s570 = smul.addr %s23, 96
          %s571 = sadd.s32 %s569, %s570
          %s572 = smul.addr %s571, 128
          %s573 = scalar_lea.hbm %s1, %s572
          %s574 = sshll.u32 %s559, 4
          %s575 = int_to_ptr.vmem [resolvable:$true] %s574
          %580 = dma.vmem_to_hbm [thread:$0]  %s575, 12288, %s573, %s556, 256, 256, 16
        $region32: #{tpu_custom_call.1} parent=23 // pred_fallthru
          _
      $region24: #{tpu_custom_call.1} parent=5 // pred_fallthru
        _
      %p581 = scmp.le.s32.totalorder 2, %s13
      // Predicated region
      $region33: #{tpu_custom_call.1} parent=5 // pred_check
        %p582 = pneg %p581
      $region34: #{tpu_custom_call.1} parent=5 // pred_check_branch
        %584 = sbr.rel (%p582) target = $region36
      $region35: #{tpu_custom_call.1} parent=5 // pred_region
        %s585 = ssub.s32 %s13, 2
        // Predicated region
        $region37: #{tpu_custom_call.1} parent=35 // pred_check
          %p586 = pneg %p95
        $region38: #{tpu_custom_call.1} parent=35 // pred_check_branch
          %588 = sbr.rel (%p586) target = $region40
        $region39: #{tpu_custom_call.1} parent=35 // pred_region
          %s589 = sand.u32 %s80, 1
          %s590 = scalar_lea.sflag [#allocation4], %s589
          %s591 = sand.u32 %s80, 1
          %s592 = smul.addr %s591, 768
          %s593 = scalar_lea.vmem [#allocation5], %s592
          %594 = dma.done %s590, 12288
        $region40: #{tpu_custom_call.1} parent=35 // pred_fallthru
          _
      $region36: #{tpu_custom_call.1} parent=5 // pred_fallthru
        _
    $region6: #{tpu_custom_call.1} parent=1 // loop_footer
      %s17 = sadd.s32 1, %s13
    $region7: #{tpu_custom_call.1} parent=1 // loop_footer_branch
      %12 = sbr.rel target = $region3
    $region8: #{tpu_custom_call.1} parent=1 // loop_exit
      _
    %595 = vsyncpa [#allocation3], 1
    %s596 = scalar_lea.sflag [#allocation3], 1
    %597 = vsyncpa %s596, 1
    %598 = vsyncpa [#allocation4], 1
    %s599 = scalar_lea.sflag [#allocation4], 1
    %600 = vsyncpa %s599, 1

</llo_original>
